<compile_context>
chip_gen: v5e
topology: v5e:2x2
jax: 0.10.0
libtpu: 0.0.40
codegen_flags: <defaults>
</compile_context>

<pallas_src>
import jax
import jax.numpy as jnp
from jax.experimental import pallas as pl
from jax.experimental.pallas import tpu as pltpu


def _extract_first_kernel(x_ref, o_ref):
    # x_ref: (rows, W) VMEM tile; o_ref: (rows, 1) VMEM tile.
    o_ref[...] = x_ref[:, 0:1]


def _choose_tile_rows(n_rows: int, w: int, itemsize: int,
                      target_bytes: int = 4 << 20) -> int:
    """Pick the row-tile size for the flattened (n_rows, W) view.

    Largest tile whose (rows, W) input block is ~target_bytes, rounded to
    sublane-friendly sizes (multiple of 32 when possible, else 8), and capped
    so the grid has >= 2 steps (pipeline overlap + v7x megacore split).
    """
    rows = max(8, target_bytes // max(1, w * itemsize))
    if n_rows > 8:
        half = -(-n_rows // 2)                 # cdiv(n_rows, 2)
        rows = min(rows, ((half + 7) // 8) * 8)
    if rows >= 32:
        rows -= rows % 32
    elif rows >= 8:
        rows -= rows % 8
    return max(1, min(rows, n_rows))


def extract_first_component(x: jax.Array) -> jax.Array:
    """x: (B, C, H, W) -> (B, C, H, 1), equivalent to torch x[:, :, :, [0]]."""
    B, C, H, W = x.shape
    n_rows = B * C * H
    # Free relabel for contiguous NCHW: every output element is row r's col 0.
    x2 = x.reshape(n_rows, W)

    rows = _choose_tile_rows(n_rows, W, jnp.dtype(x.dtype).itemsize)
    grid = (pl.cdiv(n_rows, rows),)

    out2 = pl.pallas_call(
        _extract_first_kernel,
        out_shape=jax.ShapeDtypeStruct((n_rows, 1), x.dtype),
        grid=grid,
        in_specs=[pl.BlockSpec((rows, W), lambda i: (i, 0))],
        out_specs=pl.BlockSpec((rows, 1), lambda i: (i, 0)),
        compiler_params=pltpu.CompilerParams(
            dimension_semantics=("parallel",),   # lets v7x split rows across TCs
            vmem_limit_bytes=32 * 1024 * 1024,
        ),
    )(x2)

    return out2.reshape(B, C, H, 1)


if __name__ == "__main__":
    # Parameters mirroring the module's __init__ (unused in forward).
    weight = jnp.zeros([1], dtype=jnp.float32)
    bias = jnp.zeros([1], dtype=jnp.float32)

    key = jax.random.PRNGKey(0)
    B, C, H, W = 2, 4, 16, 16
    x = jax.random.normal(key, (B, C, H, W), dtype=jnp.float32)

    out = extract_first_component(x)
    out = jax.block_until_ready(out)

    # Reference check against plain JAX indexing (same as torch x[:, :, :, [0]]).
    ref = x[:, :, :, 0:1]
    assert out.shape == (B, C, H, 1)
    assert out.dtype == x.dtype
    assert jnp.array_equal(out, ref)

    print("KERNEL_OK")
</pallas_src>

<mosaic_0001>
module attributes {stable_mosaic.version = 11 : i64} {
  func.func @_extract_first_kernel(%arg0: i32, %arg1: memref<64x16xf32, #tpu.memory_space<vmem>>, %arg2: memref<64x1xf32, #tpu.memory_space<vmem>>) attributes {dimension_semantics = [#tpu.dimension_semantics<parallel>], iteration_bounds = array<i64: 2>, scalar_prefetch = 0 : i64, scratch_operands = 0 : i64, tpu.core_type = #tpu.core_type<tc>, window_params = [{transform_indices = @transform_0, window_bounds = array<i64: 64, 16>}, {transform_indices = @transform_1, window_bounds = array<i64: 64, 1>}]} {
    %c0 = arith.constant 0 : index
    %c0_0 = arith.constant 0 : index
    %0 = vector.load %arg1[%c0, %c0_0] : memref<64x16xf32, #tpu.memory_space<vmem>>, vector<64x1xf32>
    %c0_1 = arith.constant 0 : index
    %c0_2 = arith.constant 0 : index
    %1 = vector.load %arg2[%c0_1, %c0_2] : memref<64x1xf32, #tpu.memory_space<vmem>>, vector<64x1xf32>
    tpu.vector_store %arg2[%c0_1, %c0_2], %0 {strides = array<i32>} : memref<64x1xf32, #tpu.memory_space<vmem>>, vector<64x1xf32>,
    return
  }
  func.func @transform_0(%arg0: i32) -> (i32, i32) {
    %c0_i32 = arith.constant 0 : i32
    %c0_i32_0 = arith.constant 0 : i32
    return %arg0, %c0_i32 : i32, i32
  }
  func.func @transform_1(%arg0: i32) -> (i32, i32) {
    %c0_i32 = arith.constant 0 : i32
    %c0_i32_0 = arith.constant 0 : i32
    return %arg0, %c0_i32 : i32, i32
  }
}

</mosaic_0001>

<llo_original>
// kernel: tpu_custom_call.1
$region0: #{tpu_custom_call.1}
  #allocation0 [shape = 'u32[]', space=smem, size = 0x4, offset = 0x4, fixed_abs, tag = 'smem constant byte address 0x4 - core index']
  #allocation1 [shape = 'u32[72,128]{1,0:T(1,128)}', space=vmem, size = 0x9000, scoped, tag = 'internal scratch']
  %s0 = inlined_call_operand.vmem [shape: f32[128,16], index: 0, kind: input, shape index: {}]
  %s1 = inlined_call_operand.vmem [shape: f32[128,1], index: 1, kind: output, shape index: {}]
  %s2 = sld [smem:[#allocation0]]
  $region37: #{tpu_custom_call.1} parent=0
    _
  %s4 = ssub.s32 1, %s2
  %s5 = scalar_select 0, %s4, %s2
  loop: start=0, step=1, limit=4
  $region2: #{tpu_custom_call.1} parent=0 // loop_pre_header
    _
  $region3: #{tpu_custom_call.1} parent=0 // loop_header
    %s7 = sphi 0, %s11
    %p8 = scmp.ge.s32.totalorder %s7, 4
    %s17 = sphi 0, %s19
    %s20 = sphi 0, %s17
    %s21 = sphi 0, %s20
    %s37 = sphi 0, %s21
    %s43 = sphi 0, %s45
    %s46 = sphi 0, %s43
    %s47 = sphi 0, %s46
    %s63 = sphi 0, %s47
  $region4: #{tpu_custom_call.1} parent=0 // loop_header_branch
    %10 = sbr.rel (%p8) target = $region8
  $region5: #{tpu_custom_call.1} parent=0 // loop_body
    %s12 = ssub.s32 %s7, 1
    %s13 = ssub.s32 %s7, 2
    %s14 = sadd.s32 %s7, 1
    %s15 = ssub.s32 %s7, %s14
    %p16 = scmp.eq.s32.totalorder %s15, 0
    %s18 = sadd.s32 %s17, 1
    %s19 = scalar_select %p16, %s17, %s18
    %p22 = pneg %p16
    %p23 = scmp.eq.s32.totalorder %s7, 1
    %p24 = por %p22, %p23
    %p25 = scmp.ne.s32.totalorder %s17, %s20
    %p26 = scmp.eq.s32.totalorder %s7, 0
    %p27 = por %p25, %p26
    %p28 = scmp.ne.s32.totalorder %s17, %s20
    %p29 = scmp.eq.s32.totalorder %s12, 1
    %p30 = por %p28, %p29
    %p31 = scmp.ne.s32.totalorder %s20, %s21
    %p32 = scmp.eq.s32.totalorder %s12, 0
    %p33 = por %p31, %p32
    %p34 = scmp.ne.s32.totalorder %s20, %s21
    %p35 = scmp.eq.s32.totalorder %s13, 1
    %p36 = por %p34, %p35
    %p38 = scmp.ne.s32.totalorder %s21, %s37
    %p39 = scmp.eq.s32.totalorder %s13, 0
    %p40 = por %p38, %p39
    %s41 = ssub.s32 %s7, %s14
    %p42 = scmp.eq.s32.totalorder %s41, 0
    %s44 = sadd.s32 %s43, 1
    %s45 = scalar_select %p42, %s43, %s44
    %p48 = pneg %p42
    %p49 = scmp.eq.s32.totalorder %s7, 1
    %p50 = por %p48, %p49
    %p51 = scmp.ne.s32.totalorder %s43, %s46
    %p52 = scmp.eq.s32.totalorder %s7, 0
    %p53 = por %p51, %p52
    %p54 = scmp.ne.s32.totalorder %s43, %s46
    %p55 = scmp.eq.s32.totalorder %s12, 1
    %p56 = por %p54, %p55
    %p57 = scmp.ne.s32.totalorder %s46, %s47
    %p58 = scmp.eq.s32.totalorder %s12, 0
    %p59 = por %p57, %p58
    %p60 = scmp.ne.s32.totalorder %s46, %s47
    %p61 = scmp.eq.s32.totalorder %s13, 1
    %p62 = por %p60, %p61
    %p64 = scmp.ne.s32.totalorder %s47, %s63
    %p65 = scmp.eq.s32.totalorder %s13, 0
    %p66 = por %p64, %p65
    %p67 = scmp.le.s32.totalorder 1, %s7
    %p68 = scmp.lt.s32.totalorder %s7, 3
    %p69 = pnand %p67, %p68
    %p70 = pneg %p69
    // Predicated region
    $region9: #{tpu_custom_call.1} parent=5 // pred_check
      _
    $region10: #{tpu_custom_call.1} parent=5 // pred_check_branch
      %72 = sbr.rel (%p69) target = $region12
    $region11: #{tpu_custom_call.1} parent=5 // pred_region
      %s73 = ssub.s32 %s7, 1
    $region12: #{tpu_custom_call.1} parent=5 // pred_fallthru
      _
    %p74 = scmp.lt.s32.totalorder %s7, 2
    // Predicated region
    $region13: #{tpu_custom_call.1} parent=5 // pred_check
      %p75 = pneg %p74
    $region14: #{tpu_custom_call.1} parent=5 // pred_check_branch
      %77 = sbr.rel (%p75) target = $region16
    $region15: #{tpu_custom_call.1} parent=5 // pred_region
      // Predicated region
      $region17: #{tpu_custom_call.1} parent=15 // pred_check
        %p78 = pneg %p27
      $region18: #{tpu_custom_call.1} parent=15 // pred_check_branch
        %80 = sbr.rel (%p78) target = $region20
      $region19: #{tpu_custom_call.1} parent=15 // pred_region
        %s81 = smul.u32 8, %s7
        %p82 = scmp.lt.s32.totalorder %s81, 15
        %s83 = scalar_select %p82, %s81, 15
        %s84 = smul.addr %s83, 8
        %s85 = scalar_lea.vmem %s0, %s84
        %s86 = smul.u32 8, %s7
      $region20: #{tpu_custom_call.1} parent=15 // pred_fallthru
        _
    $region16: #{tpu_custom_call.1} parent=5 // pred_fallthru
      _
    %p87 = scmp.le.s32.totalorder 1, %s7
    %p88 = scmp.lt.s32.totalorder %s7, 3
    %p89 = pnand %p87, %p88
    %p90 = pneg %p89
    // Predicated region
    $region21: #{tpu_custom_call.1} parent=5 // pred_check
      _
    $region22: #{tpu_custom_call.1} parent=5 // pred_check_branch
      %92 = sbr.rel (%p89) target = $region24
    $region23: #{tpu_custom_call.1} parent=5 // pred_region
      %s93 = ssub.s32 %s7, 1
      %s94 = smul.u32 8, %s12
      %p95 = scmp.lt.s32.totalorder %s94, 15
      %s96 = scalar_select %p95, %s94, 15
      %s97 = smul.addr %s96, 8
      %s98 = scalar_lea.vmem %s0, %s97
      %p99 = pneg %p33
      %p100 = pneg %p30
      %p101 = pneg %p59
      %p102 = pneg %p56
      %s103 = smul.u32 8, %s12
      %p104 = scmp.lt.s32.totalorder %s103, 15
      %s105 = scalar_select %p104, %s103, 15
      %s106 = smul.addr %s105, 8
      %s107 = scalar_lea.vmem %s1, %s106
      %s108 = smul.u32 8, %s12
      %p109 = scmp.lt.s32.totalorder %s108, 15
      %s110 = scalar_select %p109, %s108, 15
      %s111 = smul.addr %s110, 8
      %s112 = scalar_lea.vmem %s0, %s111
      %s113 = smul.u32 8, %s12
      %s114 = smul.u32 8, %s12
      %p115 = scmp.lt.s32.totalorder %s114, 15
      %s116 = scalar_select %p115, %s114, 15
      %s117 = smul.addr %s116, 8
      %s118 = scalar_lea.vmem %s1, %s117
      %s119 = smul.u32 8, %s12
      %v120 = vld [vmem:[%s112] sm:$0xff]
      %v121 = vld [vmem:[%s112 + $0x8] sm:$0xff]
      %v122 = vld [vmem:[%s112 + $0x10] sm:$0xff]
      %v123 = vld [vmem:[%s112 + $0x18] sm:$0xff]
      %v124 = vld [vmem:[%s112 + $0x20] sm:$0xff]
      %v125 = vld [vmem:[%s112 + $0x28] sm:$0xff]
      %v126 = vld [vmem:[%s112 + $0x30] sm:$0xff]
      %v127 = vld [vmem:[%s112 + $0x38] sm:$0xff]
      %vm128 = vcmask 7168
      %129 = vst.msk [vmem:[%s118] sm:$0xff] %vm128, %v120
      %130 = vst.msk [vmem:[%s118 + $0x8] sm:$0xff] %vm128, %v121
      %131 = vst.msk [vmem:[%s118 + $0x10] sm:$0xff] %vm128, %v122
      %132 = vst.msk [vmem:[%s118 + $0x18] sm:$0xff] %vm128, %v123
      %133 = vst.msk [vmem:[%s118 + $0x20] sm:$0xff] %vm128, %v124
      %134 = vst.msk [vmem:[%s118 + $0x28] sm:$0xff] %vm128, %v125
      %135 = vst.msk [vmem:[%s118 + $0x30] sm:$0xff] %vm128, %v126
      %136 = vst.msk [vmem:[%s118 + $0x38] sm:$0xff] %vm128, %v127
      %s137 = smul.u32 8, %s12
      %p138 = scmp.lt.s32.totalorder %s137, 15
      %s139 = scalar_select %p138, %s137, 15
      %s140 = smul.addr %s139, 8
      %s141 = scalar_lea.vmem %s1, %s140
      // Predicated region
      $region25: #{tpu_custom_call.1} parent=23 // pred_check
        %p142 = pneg %p56
      $region26: #{tpu_custom_call.1} parent=23 // pred_check_branch
        %144 = sbr.rel (%p142) target = $region28
      $region27: #{tpu_custom_call.1} parent=23 // pred_region
        %s145 = smul.u32 8, %s12
      $region28: #{tpu_custom_call.1} parent=23 // pred_fallthru
        _
    $region24: #{tpu_custom_call.1} parent=5 // pred_fallthru
      _
    %p146 = scmp.le.s32.totalorder 2, %s7
    // Predicated region
    $region29: #{tpu_custom_call.1} parent=5 // pred_check
      %p147 = pneg %p146
    $region30: #{tpu_custom_call.1} parent=5 // pred_check_branch
      %149 = sbr.rel (%p147) target = $region32
    $region31: #{tpu_custom_call.1} parent=5 // pred_region
      %s150 = ssub.s32 %s7, 2
      // Predicated region
      $region33: #{tpu_custom_call.1} parent=31 // pred_check
        %p151 = pneg %p62
      $region34: #{tpu_custom_call.1} parent=31 // pred_check_branch
        %153 = sbr.rel (%p151) target = $region36
      $region35: #{tpu_custom_call.1} parent=31 // pred_region
        %s154 = smul.u32 8, %s13
        %p155 = scmp.lt.s32.totalorder %s154, 15
        %s156 = scalar_select %p155, %s154, 15
        %s157 = smul.addr %s156, 8
        %s158 = scalar_lea.vmem %s1, %s157
      $region36: #{tpu_custom_call.1} parent=31 // pred_fallthru
        _
    $region32: #{tpu_custom_call.1} parent=5 // pred_fallthru
      _
  $region6: #{tpu_custom_call.1} parent=0 // loop_footer
    %s11 = sadd.s32 1, %s7
  $region7: #{tpu_custom_call.1} parent=0 // loop_footer_branch
    %6 = sbr.rel target = $region3
  $region8: #{tpu_custom_call.1} parent=0 // loop_exit
    _

</llo_original>
